<compile_context>
chip_gen: v5e
topology: v5e:2x2
jax: 0.10.0
libtpu: 0.0.40
codegen_flags: <defaults>
</compile_context>

<pallas_src>
import functools

import jax
import jax.numpy as jnp
from jax.experimental import pallas as pl
from jax.experimental.pallas import tpu as pltpu


def _round_up(n: int, m: int) -> int:
    return ((n + m - 1) // m) * m


def _device_kind() -> str:
    try:
        return jax.devices()[0].device_kind.lower()
    except Exception:
        return ""


def _default_block_m() -> int:
    kind = _device_kind()
    # v5e and older: 128-wide MXU -> 128-row tiles.  v6e/v7x: 2x256^2 MXU -> 256.
    if any(t in kind for t in ("v5 lite", "v5e", "v5lite", "v4", "v3", "v2")):
        return 128
    return 256


def _vmem_cap_bytes() -> int:
    # Physical VMEM: 128 MiB on v5e/v6e, 64 MiB on v7x -> leave headroom.
    if "v7" in _device_kind():
        return 56 << 20
    return 100 << 20


def prepare_mlp_params(params, d_in, weight_dtype=jnp.bfloat16):
    """One-time parameter prep (hoisted out of the per-call forward path).

    - Pads every layer's OUTPUT dim to a multiple of 128; layer l's input dim is padded
      to match layer l-1's padded output (layer 0 keeps the natural d_in).
    - Casts weights to `weight_dtype` (bf16 = MXU-native); biases stay f32 since the
      bias/activation epilogue runs on the f32 accumulator.
    Zero padding is exact for Identity/ReLU (padded columns remain exactly 0).
    """
    dims = [int(d_in)] + [int(w.shape[1]) for (w, _) in params]
    dims_pad = [int(d_in)] + [_round_up(d, 128) for d in dims[1:]]
    prepped = []
    for l, (w, b) in enumerate(params):
        rows, cols = dims_pad[l], dims_pad[l + 1]
        w_p = jnp.zeros((rows, cols), weight_dtype)
        w_p = w_p.at[: w.shape[0], : w.shape[1]].set(w.astype(weight_dtype))
        b_p = jnp.zeros((1, cols), jnp.float32)
        b_p = b_p.at[:, : b.shape[1]].set(b.astype(jnp.float32))
        prepped.append((w_p, b_p))
    return prepped, dims, dims_pad


def _fused_mlp_kernel(x_ref, *refs, act: str, n_layers: int):
    """All layers fused: intermediates never leave vregs/VMEM; f32 accumulation."""
    out_ref = refs[-1]
    wb = refs[:-1]
    y = x_ref[...]
    for l in range(n_layers):
        w = wb[2 * l][...]
        b = wb[2 * l + 1][...]
        # Operands in the weight dtype (bf16) feed the MXU at native rate; f32 accumulate.
        y = jnp.dot(y.astype(w.dtype), w, preferred_element_type=jnp.float32)
        y = y + b  # (1, Dout) f32 bias broadcasts over batch rows (free VALU filler)
        if act == "relu":
            y = jnp.maximum(y, 0.0)
        # act == "identity": no-op (matches torch.nn.Identity default)
    out_ref[...] = y.astype(out_ref.dtype)


def mlp_forward(x, prepped, dims, dims_pad, act: str = "identity", block_m=None):
    """Pallas-backed fused forward.  `prepped` comes from prepare_mlp_params (no per-call
    weight padding / casting happens here)."""
    B, Din = x.shape
    assert Din == dims[0], "x feature dim does not match prepared params"
    n_layers = len(prepped)
    if block_m is None:
        block_m = _default_block_m()

    if B <= block_m:
        bm, B_pad = B, B          # single full-dim batch block (legal for any B)
    else:
        bm = block_m
        B_pad = _round_up(B, bm)
    grid = (B_pad // bm,)

    # Pad batch rows only when the grid tiling requires it (no copy otherwise);
    # the K dim of x is never padded.
    x_in = x if B_pad == B else jnp.zeros((B_pad, Din), x.dtype).at[:B].set(x)

    # Deeper in/out pipelining only pays off on long grids.
    io_buffers = 3 if grid[0] >= 4 else None

    flat_args = [x_in]
    for (w_p, b_p) in prepped:
        flat_args += [w_p, b_p]

    def make_specs(use_pipeline_mode):
        def spec(shape, index_map, n_buf):
            if use_pipeline_mode and n_buf is not None:
                return pl.BlockSpec(shape, index_map, pipeline_mode=pl.Buffered(n_buf))
            return pl.BlockSpec(shape, index_map)

        in_specs = [spec((bm, Din), lambda i: (i, 0), io_buffers)]
        for l in range(n_layers):
            dpi, dpo = dims_pad[l], dims_pad[l + 1]
            # Constant index_map -> VMEM-resident across batch tiles; single-buffered.
            in_specs.append(spec((dpi, dpo), lambda i: (0, 0), 1))
            in_specs.append(spec((1, dpo), lambda i: (0, 0), 1))
        out_spec = spec((bm, dims_pad[-1]), lambda i: (i, 0), io_buffers)
        return in_specs, out_spec

    # VMEM budget: pipelined x/out blocks + single-buffered resident weights, with headroom.
    in_depth = io_buffers or 2
    x_bytes = bm * Din * x.dtype.itemsize * in_depth
    out_bytes = bm * dims_pad[-1] * x.dtype.itemsize * in_depth
    wb_bytes = sum(w.size * w.dtype.itemsize + b.size * b.dtype.itemsize
                   for (w, b) in prepped)
    vmem_limit = int(min(max(1.25 * (x_bytes + out_bytes + wb_bytes) + (8 << 20),
                             32 << 20),
                         _vmem_cap_bytes()))

    flops = sum(2 * B_pad * dims_pad[l] * dims_pad[l + 1] for l in range(n_layers))
    bytes_accessed = (x_in.size * x_in.dtype.itemsize
                      + sum(a.size * a.dtype.itemsize for a in flat_args[1:])
                      + B_pad * dims_pad[-1] * x.dtype.itemsize)

    kernel = functools.partial(_fused_mlp_kernel, act=act, n_layers=n_layers)
    out_shape = jax.ShapeDtypeStruct((B_pad, dims_pad[-1]), x.dtype)
    cparams = pltpu.CompilerParams(
        dimension_semantics=("parallel",),   # independent batch tiles -> shard TCs on v7x
        vmem_limit_bytes=vmem_limit,
    )
    ce = pl.CostEstimate(flops=flops, transcendentals=0, bytes_accessed=bytes_accessed)

    def run(use_pipeline_mode):
        in_specs, out_spec = make_specs(use_pipeline_mode)
        return pl.pallas_call(
            kernel,
            out_shape=out_shape,
            grid=grid,
            in_specs=in_specs,
            out_specs=out_spec,
            compiler_params=cparams,
            cost_estimate=ce,
        )(*flat_args)

    try:
        out_p = run(True)
    except Exception:
        # Installed JAX may not support BlockSpec(pipeline_mode=...)/Buffered(1);
        # fall back to default double-buffering (correctness identical).
        out_p = run(False)

    return out_p[:B, : dims[-1]]


def init_mlp_params(key, dims):
    """Deterministic PyTorch-style nn.Linear init: U(-1/sqrt(fan_in), 1/sqrt(fan_in))."""
    params = []
    for i in range(1, len(dims)):
        din, dout = dims[i - 1], dims[i]
        key, kw, kb = jax.random.split(key, 3)
        bound = 1.0 / jnp.sqrt(jnp.float32(din))
        w = jax.random.uniform(kw, (din, dout), jnp.float32, -bound, bound)
        b = jax.random.uniform(kb, (1, dout), jnp.float32, -bound, bound)
        params.append((w, b))
    return params


def mlp_reference(x, params, act: str = "identity"):
    y = x
    for (w, b) in params:
        y = y @ w + b
        if act == "relu":
            y = jnp.maximum(y, 0.0)
    return y


if __name__ == "__main__":
    key = jax.random.PRNGKey(0)
    dims = [32, 64, 128, 16]   # Linear(32,64) -> Linear(64,128) -> Linear(128,16)
    batch = 8

    key, kx = jax.random.split(key)
    x = jax.random.normal(kx, (batch, dims[0]), jnp.float32)
    params = init_mlp_params(key, dims)
    y_ref = mlp_reference(x, params, act="identity")

    # f32-weight path (sanity check of the fused structure; generous tol covers any
    # bf16-pass lowering of f32 matmuls on the MXU).
    pp32, d, dp = prepare_mlp_params(params, dims[0], weight_dtype=jnp.float32)
    y32 = jax.block_until_ready(mlp_forward(x, pp32, d, dp, act="identity"))
    assert y32.shape == (batch, dims[-1])
    assert jnp.allclose(y32, y_ref, atol=2e-2, rtol=2e-2), "f32 path mismatch vs reference"

    # bf16-weight path (MXU-native, production config), f32 accumulation.
    pp16, d, dp = prepare_mlp_params(params, dims[0], weight_dtype=jnp.bfloat16)
    y16 = jax.block_until_ready(mlp_forward(x, pp16, d, dp, act="identity"))
    assert y16.shape == (batch, dims[-1])
    assert jnp.allclose(y16, y_ref, atol=5e-2, rtol=5e-2), "bf16 path mismatch vs reference"

    # ReLU path (pyt_MLP with act_fn=nn.ReLU()).
    yr = jax.block_until_ready(mlp_forward(x, pp16, d, dp, act="relu"))
    yr_ref = mlp_reference(x, params, act="relu")
    assert jnp.allclose(yr, yr_ref, atol=5e-2, rtol=5e-2), "relu mismatch vs reference"

    print("KERNEL_OK")
</pallas_src>

<mosaic_0001>
module attributes {stable_mosaic.version = 11 : i64} {
  func.func @_fused_mlp_kernel(%arg0: i32, %arg1: memref<8x32xf32, #tpu.memory_space<vmem>>, %arg2: memref<32x128xf32, #tpu.memory_space<vmem>>, %arg3: memref<1x128xf32, #tpu.memory_space<vmem>>, %arg4: memref<128x128xf32, #tpu.memory_space<vmem>>, %arg5: memref<1x128xf32, #tpu.memory_space<vmem>>, %arg6: memref<128x128xf32, #tpu.memory_space<vmem>>, %arg7: memref<1x128xf32, #tpu.memory_space<vmem>>, %arg8: memref<8x128xf32, #tpu.memory_space<vmem>>) attributes {dimension_semantics = [#tpu.dimension_semantics<parallel>], iteration_bounds = array<i64: 1>, scalar_prefetch = 0 : i64, scratch_operands = 0 : i64, tpu.core_type = #tpu.core_type<tc>, window_params = [{transform_indices = @transform_0, window_bounds = array<i64: 8, 32>}, {pipeline_mode = #tpu.pipeline_mode<synchronous>, transform_indices = @transform_1, window_bounds = array<i64: 32, 128>}, {pipeline_mode = #tpu.pipeline_mode<synchronous>, transform_indices = @transform_2, window_bounds = array<i64: 1, 128>}, {pipeline_mode = #tpu.pipeline_mode<synchronous>, transform_indices = @transform_3, window_bounds = array<i64: 128, 128>}, {pipeline_mode = #tpu.pipeline_mode<synchronous>, transform_indices = @transform_4, window_bounds = array<i64: 1, 128>}, {pipeline_mode = #tpu.pipeline_mode<synchronous>, transform_indices = @transform_5, window_bounds = array<i64: 128, 128>}, {pipeline_mode = #tpu.pipeline_mode<synchronous>, transform_indices = @transform_6, window_bounds = array<i64: 1, 128>}, {transform_indices = @transform_7, window_bounds = array<i64: 8, 128>}]} {
    %c0 = arith.constant 0 : index
    %c0_0 = arith.constant 0 : index
    %0 = vector.load %arg1[%c0, %c0_0] : memref<8x32xf32, #tpu.memory_space<vmem>>, vector<8x32xf32>
    %c0_1 = arith.constant 0 : index
    %c0_2 = arith.constant 0 : index
    %1 = vector.load %arg2[%c0_1, %c0_2] : memref<32x128xf32, #tpu.memory_space<vmem>>, vector<32x128xf32>
    %c0_3 = arith.constant 0 : index
    %c0_4 = arith.constant 0 : index
    %2 = vector.load %arg3[%c0_3, %c0_4] : memref<1x128xf32, #tpu.memory_space<vmem>>, vector<1x128xf32>
    %cst = arith.constant dense<0.000000e+00> : vector<8x128xf32>
    %3 = tpu.matmul %0, %1, %cst {dimension_numbers = #tpu.dot_dimension_numbers<[1], [0], [0], [1], [0, 0, 1, 1], [], []>} : vector<8x32xf32>, vector<32x128xf32>, vector<8x128xf32> -> vector<8x128xf32>
    %4 = vector.broadcast %2 : vector<1x128xf32> to vector<8x128xf32>
    %5 = arith.addf %3, %4 : vector<8x128xf32>
    %c0_5 = arith.constant 0 : index
    %c0_6 = arith.constant 0 : index
    %6 = vector.load %arg4[%c0_5, %c0_6] : memref<128x128xf32, #tpu.memory_space<vmem>>, vector<128x128xf32>
    %c0_7 = arith.constant 0 : index
    %c0_8 = arith.constant 0 : index
    %7 = vector.load %arg5[%c0_7, %c0_8] : memref<1x128xf32, #tpu.memory_space<vmem>>, vector<1x128xf32>
    %cst_9 = arith.constant dense<0.000000e+00> : vector<8x128xf32>
    %8 = tpu.matmul %5, %6, %cst_9 {dimension_numbers = #tpu.dot_dimension_numbers<[1], [0], [0], [1], [0, 0, 1, 1], [], []>} : vector<8x128xf32>, vector<128x128xf32>, vector<8x128xf32> -> vector<8x128xf32>
    %9 = vector.broadcast %7 : vector<1x128xf32> to vector<8x128xf32>
    %10 = arith.addf %8, %9 : vector<8x128xf32>
    %c0_10 = arith.constant 0 : index
    %c0_11 = arith.constant 0 : index
    %11 = vector.load %arg6[%c0_10, %c0_11] : memref<128x128xf32, #tpu.memory_space<vmem>>, vector<128x128xf32>
    %c0_12 = arith.constant 0 : index
    %c0_13 = arith.constant 0 : index
    %12 = vector.load %arg7[%c0_12, %c0_13] : memref<1x128xf32, #tpu.memory_space<vmem>>, vector<1x128xf32>
    %cst_14 = arith.constant dense<0.000000e+00> : vector<8x128xf32>
    %13 = tpu.matmul %10, %11, %cst_14 {dimension_numbers = #tpu.dot_dimension_numbers<[1], [0], [0], [1], [0, 0, 1, 1], [], []>} : vector<8x128xf32>, vector<128x128xf32>, vector<8x128xf32> -> vector<8x128xf32>
    %14 = vector.broadcast %12 : vector<1x128xf32> to vector<8x128xf32>
    %15 = arith.addf %13, %14 : vector<8x128xf32>
    %c0_15 = arith.constant 0 : index
    %c0_16 = arith.constant 0 : index
    %16 = vector.load %arg8[%c0_15, %c0_16] : memref<8x128xf32, #tpu.memory_space<vmem>>, vector<8x128xf32>
    tpu.vector_store %arg8[%c0_15, %c0_16], %15 {strides = array<i32>} : memref<8x128xf32, #tpu.memory_space<vmem>>, vector<8x128xf32>,
    return
  }
  func.func @transform_0(%arg0: i32) -> (i32, i32) {
    %c0_i32 = arith.constant 0 : i32
    %c0_i32_0 = arith.constant 0 : i32
    return %arg0, %c0_i32 : i32, i32
  }
  func.func @transform_1(%arg0: i32) -> (i32, i32) {
    %c0_i32 = arith.constant 0 : i32
    %c0_i32_0 = arith.constant 0 : i32
    %c0_i32_1 = arith.constant 0 : i32
    return %c0_i32, %c0_i32_0 : i32, i32
  }
  func.func @transform_2(%arg0: i32) -> (i32, i32) {
    %c0_i32 = arith.constant 0 : i32
    %c0_i32_0 = arith.constant 0 : i32
    %c0_i32_1 = arith.constant 0 : i32
    return %c0_i32, %c0_i32_0 : i32, i32
  }
  func.func @transform_3(%arg0: i32) -> (i32, i32) {
    %c0_i32 = arith.constant 0 : i32
    %c0_i32_0 = arith.constant 0 : i32
    %c0_i32_1 = arith.constant 0 : i32
    return %c0_i32, %c0_i32_0 : i32, i32
  }
  func.func @transform_4(%arg0: i32) -> (i32, i32) {
    %c0_i32 = arith.constant 0 : i32
    %c0_i32_0 = arith.constant 0 : i32
    %c0_i32_1 = arith.constant 0 : i32
    return %c0_i32, %c0_i32_0 : i32, i32
  }
  func.func @transform_5(%arg0: i32) -> (i32, i32) {
    %c0_i32 = arith.constant 0 : i32
    %c0_i32_0 = arith.constant 0 : i32
    %c0_i32_1 = arith.constant 0 : i32
    return %c0_i32, %c0_i32_0 : i32, i32
  }
  func.func @transform_6(%arg0: i32) -> (i32, i32) {
    %c0_i32 = arith.constant 0 : i32
    %c0_i32_0 = arith.constant 0 : i32
    %c0_i32_1 = arith.constant 0 : i32
    return %c0_i32, %c0_i32_0 : i32, i32
  }
  func.func @transform_7(%arg0: i32) -> (i32, i32) {
    %c0_i32 = arith.constant 0 : i32
    %c0_i32_0 = arith.constant 0 : i32
    return %arg0, %c0_i32 : i32, i32
  }
}

module attributes {stable_mosaic.version = 11 : i64} {
  func.func @_fused_mlp_kernel(%arg0: i32, %arg1: memref<8x32xf32, #tpu.memory_space<vmem>>, %arg2: memref<32x128xf32, #tpu.memory_space<vmem>>, %arg3: memref<1x128xf32, #tpu.memory_space<vmem>>, %arg4: memref<128x128xf32, #tpu.memory_space<vmem>>, %arg5: memref<1x128xf32, #tpu.memory_space<vmem>>, %arg6: memref<128x128xf32, #tpu.memory_space<vmem>>, %arg7: memref<1x128xf32, #tpu.memory_space<vmem>>, %arg8: memref<8x128xf32, #tpu.memory_space<vmem>>) attributes {dimension_semantics = [#tpu.dimension_semantics<parallel>], iteration_bounds = array<i64: 1>, scalar_prefetch = 0 : i64, scratch_operands = 0 : i64, tpu.core_type = #tpu.core_type<tc>, window_params = [{transform_indices = @transform_0, window_bounds = array<i64: 8, 32>}, {pipeline_mode = #tpu.pipeline_mode<synchronous>, transform_indices = @transform_1, window_bounds = array<i64: 32, 128>}, {pipeline_mode = #tpu.pipeline_mode<synchronous>, transform_indices = @transform_2, window_bounds = array<i64: 1, 128>}, {pipeline_mode = #tpu.pipeline_mode<synchronous>, transform_indices = @transform_3, window_bounds = array<i64: 128, 128>}, {pipeline_mode = #tpu.pipeline_mode<synchronous>, transform_indices = @transform_4, window_bounds = array<i64: 1, 128>}, {pipeline_mode = #tpu.pipeline_mode<synchronous>, transform_indices = @transform_5, window_bounds = array<i64: 128, 128>}, {pipeline_mode = #tpu.pipeline_mode<synchronous>, transform_indices = @transform_6, window_bounds = array<i64: 1, 128>}, {transform_indices = @transform_7, window_bounds = array<i64: 8, 128>}]} {
    %c0 = arith.constant 0 : index
    %c0_0 = arith.constant 0 : index
    %0 = vector.load %arg1[%c0, %c0_0] : memref<8x32xf32, #tpu.memory_space<vmem>>, vector<8x32xf32>
    %c0_1 = arith.constant 0 : index
    %c0_2 = arith.constant 0 : index
    %1 = vector.load %arg2[%c0_1, %c0_2] : memref<32x128xf32, #tpu.memory_space<vmem>>, vector<32x128xf32>
    %c0_3 = arith.constant 0 : index
    %c0_4 = arith.constant 0 : index
    %2 = vector.load %arg3[%c0_3, %c0_4] : memref<1x128xf32, #tpu.memory_space<vmem>>, vector<1x128xf32>
    %cst = arith.constant dense<0.000000e+00> : vector<8x128xf32>
    %3 = tpu.matmul %0, %1, %cst {dimension_numbers = #tpu.dot_dimension_numbers<[1], [0], [0], [1], [0, 0, 1, 1], [], []>} : vector<8x32xf32>, vector<32x128xf32>, vector<8x128xf32> -> vector<8x128xf32>
    %4 = vector.broadcast %2 : vector<1x128xf32> to vector<8x128xf32>
    %5 = arith.addf %3, %4 : vector<8x128xf32>
    %c0_5 = arith.constant 0 : index
    %c0_6 = arith.constant 0 : index
    %6 = vector.load %arg4[%c0_5, %c0_6] : memref<128x128xf32, #tpu.memory_space<vmem>>, vector<128x128xf32>
    %c0_7 = arith.constant 0 : index
    %c0_8 = arith.constant 0 : index
    %7 = vector.load %arg5[%c0_7, %c0_8] : memref<1x128xf32, #tpu.memory_space<vmem>>, vector<1x128xf32>
    %cst_9 = arith.constant dense<0.000000e+00> : vector<8x128xf32>
    %8 = tpu.matmul %5, %6, %cst_9 {dimension_numbers = #tpu.dot_dimension_numbers<[1], [0], [0], [1], [0, 0, 1, 1], [], []>} : vector<8x128xf32>, vector<128x128xf32>, vector<8x128xf32> -> vector<8x128xf32>
    %9 = vector.broadcast %7 : vector<1x128xf32> to vector<8x128xf32>
    %10 = arith.addf %8, %9 : vector<8x128xf32>
    %c0_10 = arith.constant 0 : index
    %c0_11 = arith.constant 0 : index
    %11 = vector.load %arg6[%c0_10, %c0_11] : memref<128x128xf32, #tpu.memory_space<vmem>>, vector<128x128xf32>
    %c0_12 = arith.constant 0 : index
    %c0_13 = arith.constant 0 : index
    %12 = vector.load %arg7[%c0_12, %c0_13] : memref<1x128xf32, #tpu.memory_space<vmem>>, vector<1x128xf32>
    %cst_14 = arith.constant dense<0.000000e+00> : vector<8x128xf32>
    %13 = tpu.matmul %10, %11, %cst_14 {dimension_numbers = #tpu.dot_dimension_numbers<[1], [0], [0], [1], [0, 0, 1, 1], [], []>} : vector<8x128xf32>, vector<128x128xf32>, vector<8x128xf32> -> vector<8x128xf32>
    %14 = vector.broadcast %12 : vector<1x128xf32> to vector<8x128xf32>
    %15 = arith.addf %13, %14 : vector<8x128xf32>
    %c0_15 = arith.constant 0 : index
    %c0_16 = arith.constant 0 : index
    %16 = vector.load %arg8[%c0_15, %c0_16] : memref<8x128xf32, #tpu.memory_space<vmem>>, vector<8x128xf32>
    tpu.vector_store %arg8[%c0_15, %c0_16], %15 {strides = array<i32>} : memref<8x128xf32, #tpu.memory_space<vmem>>, vector<8x128xf32>,
    return
  }
  func.func @transform_0(%arg0: i32) -> (i32, i32) {
    %c0_i32 = arith.constant 0 : i32
    %c0_i32_0 = arith.constant 0 : i32
    return %arg0, %c0_i32 : i32, i32
  }
  func.func @transform_1(%arg0: i32) -> (i32, i32) {
    %c0_i32 = arith.constant 0 : i32
    %c0_i32_0 = arith.constant 0 : i32
    %c0_i32_1 = arith.constant 0 : i32
    return %c0_i32, %c0_i32_0 : i32, i32
  }
  func.func @transform_2(%arg0: i32) -> (i32, i32) {
    %c0_i32 = arith.constant 0 : i32
    %c0_i32_0 = arith.constant 0 : i32
    %c0_i32_1 = arith.constant 0 : i32
    return %c0_i32, %c0_i32_0 : i32, i32
  }
  func.func @transform_3(%arg0: i32) -> (i32, i32) {
    %c0_i32 = arith.constant 0 : i32
    %c0_i32_0 = arith.constant 0 : i32
    %c0_i32_1 = arith.constant 0 : i32
    return %c0_i32, %c0_i32_0 : i32, i32
  }
  func.func @transform_4(%arg0: i32) -> (i32, i32) {
    %c0_i32 = arith.constant 0 : i32
    %c0_i32_0 = arith.constant 0 : i32
    %c0_i32_1 = arith.constant 0 : i32
    return %c0_i32, %c0_i32_0 : i32, i32
  }
  func.func @transform_5(%arg0: i32) -> (i32, i32) {
    %c0_i32 = arith.constant 0 : i32
    %c0_i32_0 = arith.constant 0 : i32
    %c0_i32_1 = arith.constant 0 : i32
    return %c0_i32, %c0_i32_0 : i32, i32
  }
  func.func @transform_6(%arg0: i32) -> (i32, i32) {
    %c0_i32 = arith.constant 0 : i32
    %c0_i32_0 = arith.constant 0 : i32
    %c0_i32_1 = arith.constant 0 : i32
    return %c0_i32, %c0_i32_0 : i32, i32
  }
  func.func @transform_7(%arg0: i32) -> (i32, i32) {
    %c0_i32 = arith.constant 0 : i32
    %c0_i32_0 = arith.constant 0 : i32
    return %arg0, %c0_i32 : i32, i32
  }
}

</mosaic_0001>

<llo_original>
// kernel: tpu_custom_call.1
$region0: #{tpu_custom_call.1}
  #allocation0 [shape = 'u32[]', space=smem, size = 0x4, offset = 0x4, fixed_abs, tag = 'smem constant byte address 0x4 - core index']
  #allocation1 [shape = 'u32[72,128]{1,0:T(1,128)}', space=vmem, size = 0x9000, scoped, tag = 'internal scratch']
  %s0 = inlined_call_operand.hbm [shape: f32[8,32], index: 0, kind: input, shape index: {}]
  %s1 = inlined_call_operand.hbm [shape: f32[32,128], index: 1, kind: input, shape index: {}]
  %s2 = inlined_call_operand.vmem [shape: f32[1,128], index: 2, kind: input, shape index: {}]
  %s3 = inlined_call_operand.hbm [shape: f32[128,128], index: 3, kind: input, shape index: {}]
  %s4 = inlined_call_operand.vmem [shape: f32[1,128], index: 4, kind: input, shape index: {}]
  %s5 = inlined_call_operand.hbm [shape: f32[128,128], index: 5, kind: input, shape index: {}]
  %s6 = inlined_call_operand.vmem [shape: f32[1,128], index: 6, kind: input, shape index: {}]
  %s7 = inlined_call_operand.hbm [shape: f32[8,128], index: 7, kind: output, shape index: {}]
  %s8 = sld [smem:[#allocation0]]
  $region54: #{tpu_custom_call.1} parent=0
    _
  %s10 = ssub.s32 1, %s8
  %s11 = scalar_select 0, %s10, %s8
  $region1: #{tpu_custom_call.1} parent=0
    #allocation2 [shape = 'u8[4096]{0}', space=vmem, size = 0x1000, scoped, tag = 'input window, operand 0, single buffered']
    #allocation3 [shape = 's32[1]{0}', space=sflag, size = 0x4, scoped, tag = 'scoped memory for tpu_custom_call.1']
    #allocation4 [shape = 's32[1]{0}', space=sflag, size = 0x4, scoped, tag = 'scoped memory for tpu_custom_call.1']
    #allocation5 [shape = 'u8[16384]{0}', space=vmem, size = 0x4000, scoped, tag = 'input window, operand 1, single buffered']
    #allocation6 [shape = 's32[1]{0}', space=sflag, size = 0x4, scoped, tag = 'scoped memory for tpu_custom_call.1']
    #allocation7 [shape = 'u8[65536]{0}', space=vmem, size = 0x10000, scoped, tag = 'input window, operand 3, single buffered']
    #allocation8 [shape = 'u8[65536]{0}', space=vmem, size = 0x10000, scoped, tag = 'input window, operand 5, single buffered']
    #allocation9 [shape = 's32[1]{0}', space=sflag, size = 0x4, scoped, tag = 'scoped memory for tpu_custom_call.1']
    #allocation10 [shape = 'u8[4096]{0}', space=vmem, size = 0x1000, scoped, tag = 'output window, operand 0, single buffered']
    %12 = vsyncpa [#allocation3], 0
    %13 = vsyncpa [#allocation6], 0
    %14 = vsyncpa [#allocation9], 0
    %15 = vsyncpa [#allocation4], 0
    // Predicated region
    $region2: #{tpu_custom_call.1} parent=1 // pred_check
      _
    $region3: #{tpu_custom_call.1} parent=1 // pred_check_branch
      %17 = sbr.rel (0) target = $region5
    $region4: #{tpu_custom_call.1} parent=1 // pred_region
      %19 = vsyncadd [#allocation3], 0
      %s21 = sshll.u32 %s0, 4
      %s22 = int_to_ptr.hbm [resolvable:$true] %s21
      %s23 = sshll.u32 [#allocation2], 4
      %s24 = int_to_ptr.vmem [resolvable:$true] %s23
      %26 = dma.hbm_to_vmem [thread:$0]  %s22, 128, %s24, [#allocation3]
    $region5: #{tpu_custom_call.1} parent=1 // pred_fallthru
      _
    // Predicated region
    $region6: #{tpu_custom_call.1} parent=1 // pred_check
      _
    $region7: #{tpu_custom_call.1} parent=1 // pred_check_branch
      %28 = sbr.rel (0) target = $region9
    $region8: #{tpu_custom_call.1} parent=1 // pred_region
      %30 = vsyncadd [#allocation6], 0
      %s31 = sshll.u32 %s1, 4
      %s32 = int_to_ptr.hbm [resolvable:$true] %s31
      %s33 = sshll.u32 [#allocation5], 4
      %s34 = int_to_ptr.vmem [resolvable:$true] %s33
      %39 = dma.hbm_to_vmem [thread:$0]  %s32, 512, %s34, [#allocation6], 128, 128, 8
    $region9: #{tpu_custom_call.1} parent=1 // pred_fallthru
      _
    // Predicated region
    $region10: #{tpu_custom_call.1} parent=1 // pred_check
      _
    $region11: #{tpu_custom_call.1} parent=1 // pred_check_branch
      %41 = sbr.rel (0) target = $region13
    $region12: #{tpu_custom_call.1} parent=1 // pred_region
      _
    $region13: #{tpu_custom_call.1} parent=1 // pred_fallthru
      _
    // Predicated region
    $region14: #{tpu_custom_call.1} parent=1 // pred_check
      _
    $region15: #{tpu_custom_call.1} parent=1 // pred_check_branch
      %43 = sbr.rel (0) target = $region17
    $region16: #{tpu_custom_call.1} parent=1 // pred_region
      %45 = vsyncadd [#allocation6], 0
      %s46 = sshll.u32 %s3, 4
      %s47 = int_to_ptr.hbm [resolvable:$true] %s46
      %s48 = sshll.u32 [#allocation7], 4
      %s49 = int_to_ptr.vmem [resolvable:$true] %s48
      %54 = dma.hbm_to_vmem [thread:$0]  %s47, 2048, %s49, [#allocation6], 128, 128, 8
    $region17: #{tpu_custom_call.1} parent=1 // pred_fallthru
      _
    // Predicated region
    $region18: #{tpu_custom_call.1} parent=1 // pred_check
      _
    $region19: #{tpu_custom_call.1} parent=1 // pred_check_branch
      %56 = sbr.rel (0) target = $region21
    $region20: #{tpu_custom_call.1} parent=1 // pred_region
      _
    $region21: #{tpu_custom_call.1} parent=1 // pred_fallthru
      _
    // Predicated region
    $region22: #{tpu_custom_call.1} parent=1 // pred_check
      _
    $region23: #{tpu_custom_call.1} parent=1 // pred_check_branch
      %58 = sbr.rel (0) target = $region25
    $region24: #{tpu_custom_call.1} parent=1 // pred_region
      %60 = vsyncadd [#allocation9], 0
      %s61 = sshll.u32 %s5, 4
      %s62 = int_to_ptr.hbm [resolvable:$true] %s61
      %s63 = sshll.u32 [#allocation8], 4
      %s64 = int_to_ptr.vmem [resolvable:$true] %s63
      %69 = dma.hbm_to_vmem [thread:$0]  %s62, 2048, %s64, [#allocation9], 128, 128, 8
    $region25: #{tpu_custom_call.1} parent=1 // pred_fallthru
      _
    // Predicated region
    $region26: #{tpu_custom_call.1} parent=1 // pred_check
      _
    $region27: #{tpu_custom_call.1} parent=1 // pred_check_branch
      %71 = sbr.rel (0) target = $region29
    $region28: #{tpu_custom_call.1} parent=1 // pred_region
      _
    $region29: #{tpu_custom_call.1} parent=1 // pred_fallthru
      _
    // Predicated region
    $region30: #{tpu_custom_call.1} parent=1 // pred_check
      _
    $region31: #{tpu_custom_call.1} parent=1 // pred_check_branch
      %73 = sbr.rel (0) target = $region33
    $region32: #{tpu_custom_call.1} parent=1 // pred_region
      %75 = dma.done [#allocation3], 128
    $region33: #{tpu_custom_call.1} parent=1 // pred_fallthru
      _
    // Predicated region
    $region34: #{tpu_custom_call.1} parent=1 // pred_check
      _
    $region35: #{tpu_custom_call.1} parent=1 // pred_check_branch
      %77 = sbr.rel (0) target = $region37
    $region36: #{tpu_custom_call.1} parent=1 // pred_region
      %79 = dma.done [#allocation6], 512
    $region37: #{tpu_custom_call.1} parent=1 // pred_fallthru
      _
    // Predicated region
    $region38: #{tpu_custom_call.1} parent=1 // pred_check
      _
    $region39: #{tpu_custom_call.1} parent=1 // pred_check_branch
      %81 = sbr.rel (0) target = $region41
    $region40: #{tpu_custom_call.1} parent=1 // pred_region
      %83 = dma.done [#allocation6], 2048
    $region41: #{tpu_custom_call.1} parent=1 // pred_fallthru
      _
    // Predicated region
    $region42: #{tpu_custom_call.1} parent=1 // pred_check
      _
    $region43: #{tpu_custom_call.1} parent=1 // pred_check_branch
      %85 = sbr.rel (0) target = $region45
    $region44: #{tpu_custom_call.1} parent=1 // pred_region
      %87 = dma.done [#allocation9], 2048
    $region45: #{tpu_custom_call.1} parent=1 // pred_fallthru
      _
    %v88 = vld [vmem:[#allocation2] sm:$0xff]
    %v89 = vld [vmem:[#allocation5] sm:$0xff]
    %v90 = vld [vmem:[#allocation5 + $0x8] sm:$0xff]
    %v91 = vld [vmem:[#allocation5 + $0x10] sm:$0xff]
    %v92 = vld [vmem:[#allocation5 + $0x18] sm:$0xff]
    %v93 = vld [vmem:[%s2] sm:$0x1]
    %v95 = vperm.slane %v93, 0
    %vm97 = vcmask 261120
    %v99 = vsel %vm97, %v88, 0
    %101 = vmatpush.msra.mxu0 0.0
    %102 = vmatpush.msra.mxu0 0.0
    %103 = vmatpush.msra.mxu0 0.0
    %104 = vmatpush.msra.mxu0 0.0
    %105 = vmatpush.msra.mxu0 0.0
    %106 = vmatpush.msra.mxu0 0.0
    %107 = vmatpush.msra.mxu0 0.0
    %108 = vmatpush.msra.mxu0 0.0
    %109 = vmatpush.msra.mxu0 0.0
    %110 = vmatpush.msra.mxu0 0.0
    %111 = vmatpush.msra.mxu0 0.0
    %112 = vmatpush.msra.mxu0 0.0
    %113 = vmatpush.msra.mxu0 %v92
    %114 = vmatpush.msra.mxu0 %v91
    %115 = vmatpush.msra.mxu0 %v90
    %116 = vmatpush.msra.mxu0 %v89
    %117 = vmatmul.f32.gmra.mxu0 %v99
    %v118 = vpop.f32.mrf.mxu0
    %v119 = vadd.f32 %v95, %v118
    %120 = vdwg.mxu0
    %v121 = vld [vmem:[#allocation7] sm:$0xff]
    %v122 = vld [vmem:[#allocation7 + $0x8] sm:$0xff]
    %v123 = vld [vmem:[#allocation7 + $0x10] sm:$0xff]
    %v124 = vld [vmem:[#allocation7 + $0x18] sm:$0xff]
    %v125 = vld [vmem:[#allocation7 + $0x20] sm:$0xff]
    %v126 = vld [vmem:[#allocation7 + $0x28] sm:$0xff]
    %v127 = vld [vmem:[#allocation7 + $0x30] sm:$0xff]
    %v128 = vld [vmem:[#allocation7 + $0x38] sm:$0xff]
    %v129 = vld [vmem:[#allocation7 + $0x40] sm:$0xff]
    %v130 = vld [vmem:[#allocation7 + $0x48] sm:$0xff]
    %v131 = vld [vmem:[#allocation7 + $0x50] sm:$0xff]
    %v132 = vld [vmem:[#allocation7 + $0x58] sm:$0xff]
    %v133 = vld [vmem:[#allocation7 + $0x60] sm:$0xff]
    %v134 = vld [vmem:[#allocation7 + $0x68] sm:$0xff]
    %v135 = vld [vmem:[#allocation7 + $0x70] sm:$0xff]
    %v136 = vld [vmem:[#allocation7 + $0x78] sm:$0xff]
    %v137 = vld [vmem:[%s4] sm:$0x1]
    %v139 = vperm.slane %v137, 0
    %141 = vmatpush.msra.mxu0 %v136
    %142 = vmatpush.msra.mxu0 %v135
    %143 = vmatpush.msra.mxu0 %v134
    %144 = vmatpush.msra.mxu0 %v133
    %145 = vmatpush.msra.mxu0 %v132
    %146 = vmatpush.msra.mxu0 %v131
    %147 = vmatpush.msra.mxu0 %v130
    %148 = vmatpush.msra.mxu0 %v129
    %149 = vmatpush.msra.mxu0 %v128
    %150 = vmatpush.msra.mxu0 %v127
    %151 = vmatpush.msra.mxu0 %v126
    %152 = vmatpush.msra.mxu0 %v125
    %153 = vmatpush.msra.mxu0 %v124
    %154 = vmatpush.msra.mxu0 %v123
    %155 = vmatpush.msra.mxu0 %v122
    %156 = vmatpush.msra.mxu0 %v121
    %157 = vmatmul.f32.gmra.mxu0 %v119
    %v158 = vpop.f32.mrf.mxu0
    %v159 = vadd.f32 %v139, %v158
    %160 = vdwg.mxu0
    %v161 = vld [vmem:[#allocation8] sm:$0xff]
    %v162 = vld [vmem:[#allocation8 + $0x8] sm:$0xff]
    %v163 = vld [vmem:[#allocation8 + $0x10] sm:$0xff]
    %v164 = vld [vmem:[#allocation8 + $0x18] sm:$0xff]
    %v165 = vld [vmem:[#allocation8 + $0x20] sm:$0xff]
    %v166 = vld [vmem:[#allocation8 + $0x28] sm:$0xff]
    %v167 = vld [vmem:[#allocation8 + $0x30] sm:$0xff]
    %v168 = vld [vmem:[#allocation8 + $0x38] sm:$0xff]
    %v169 = vld [vmem:[#allocation8 + $0x40] sm:$0xff]
    %v170 = vld [vmem:[#allocation8 + $0x48] sm:$0xff]
    %v171 = vld [vmem:[#allocation8 + $0x50] sm:$0xff]
    %v172 = vld [vmem:[#allocation8 + $0x58] sm:$0xff]
    %v173 = vld [vmem:[#allocation8 + $0x60] sm:$0xff]
    %v174 = vld [vmem:[#allocation8 + $0x68] sm:$0xff]
    %v175 = vld [vmem:[#allocation8 + $0x70] sm:$0xff]
    %v176 = vld [vmem:[#allocation8 + $0x78] sm:$0xff]
    %v177 = vld [vmem:[%s6] sm:$0x1]
    %v179 = vperm.slane %v177, 0
    %181 = vmatpush.msra.mxu0 %v176
    %182 = vmatpush.msra.mxu0 %v175
    %183 = vmatpush.msra.mxu0 %v174
    %184 = vmatpush.msra.mxu0 %v173
    %185 = vmatpush.msra.mxu0 %v172
    %186 = vmatpush.msra.mxu0 %v171
    %187 = vmatpush.msra.mxu0 %v170
    %188 = vmatpush.msra.mxu0 %v169
    %189 = vmatpush.msra.mxu0 %v168
    %190 = vmatpush.msra.mxu0 %v167
    %191 = vmatpush.msra.mxu0 %v166
    %192 = vmatpush.msra.mxu0 %v165
    %193 = vmatpush.msra.mxu0 %v164
    %194 = vmatpush.msra.mxu0 %v163
    %195 = vmatpush.msra.mxu0 %v162
    %196 = vmatpush.msra.mxu0 %v161
    %197 = vmatmul.f32.gmra.mxu0 %v159
    %v198 = vpop.f32.mrf.mxu0
    %v199 = vadd.f32 %v179, %v198
    %200 = vdwg.mxu0
    %201 = vst [vmem:[#allocation10] sm:$0xff] %v199
    // Predicated region
    $region46: #{tpu_custom_call.1} parent=1 // pred_check
      _
    $region47: #{tpu_custom_call.1} parent=1 // pred_check_branch
      %203 = sbr.rel (0) target = $region49
    $region48: #{tpu_custom_call.1} parent=1 // pred_region
      %205 = vsyncadd [#allocation4], 0
      %s207 = sshll.u32 [#allocation10], 4
      %s208 = int_to_ptr.vmem [resolvable:$true] %s207
      %s209 = sshll.u32 %s7, 4
      %s210 = int_to_ptr.hbm [resolvable:$true] %s209
      %212 = dma.vmem_to_hbm [thread:$0]  %s208, 128, %s210, [#allocation4]
    $region49: #{tpu_custom_call.1} parent=1 // pred_fallthru
      _
    // Predicated region
    $region50: #{tpu_custom_call.1} parent=1 // pred_check
      _
    $region51: #{tpu_custom_call.1} parent=1 // pred_check_branch
      %214 = sbr.rel (0) target = $region53
    $region52: #{tpu_custom_call.1} parent=1 // pred_region
      %216 = dma.done [#allocation4], 128
    $region53: #{tpu_custom_call.1} parent=1 // pred_fallthru
      _
    %217 = vsyncpa [#allocation3], 1
    %218 = vsyncpa [#allocation6], 1
    %219 = vsyncpa [#allocation9], 1
    %220 = vsyncpa [#allocation4], 1

// kernel: tpu_custom_call.1
$region0: #{tpu_custom_call.1}
  #allocation0 [shape = 'u32[]', space=smem, size = 0x4, offset = 0x4, fixed_abs, tag = 'smem constant byte address 0x4 - core index']
  #allocation1 [shape = 'u32[72,128]{1,0:T(1,128)}', space=vmem, size = 0x9000, scoped, tag = 'internal scratch']
  %s0 = inlined_call_operand.hbm [shape: f32[8,32], index: 0, kind: input, shape index: {}]
  %s1 = inlined_call_operand.hbm [shape: f32[32,128], index: 1, kind: input, shape index: {}]
  %s2 = inlined_call_operand.vmem [shape: f32[1,128], index: 2, kind: input, shape index: {}]
  %s3 = inlined_call_operand.hbm [shape: f32[128,128], index: 3, kind: input, shape index: {}]
  %s4 = inlined_call_operand.vmem [shape: f32[1,128], index: 4, kind: input, shape index: {}]
  %s5 = inlined_call_operand.hbm [shape: f32[128,128], index: 5, kind: input, shape index: {}]
  %s6 = inlined_call_operand.vmem [shape: f32[1,128], index: 6, kind: input, shape index: {}]
  %s7 = inlined_call_operand.hbm [shape: f32[8,128], index: 7, kind: output, shape index: {}]
  %s8 = sld [smem:[#allocation0]]
  $region54: #{tpu_custom_call.1} parent=0
    _
  %s10 = ssub.s32 1, %s8
  %s11 = scalar_select 0, %s10, %s8
  $region1: #{tpu_custom_call.1} parent=0
    #allocation2 [shape = 'u8[4096]{0}', space=vmem, size = 0x1000, scoped, tag = 'input window, operand 0, single buffered']
    #allocation3 [shape = 's32[1]{0}', space=sflag, size = 0x4, scoped, tag = 'scoped memory for tpu_custom_call.1']
    #allocation4 [shape = 's32[1]{0}', space=sflag, size = 0x4, scoped, tag = 'scoped memory for tpu_custom_call.1']
    #allocation5 [shape = 'u8[16384]{0}', space=vmem, size = 0x4000, scoped, tag = 'input window, operand 1, single buffered']
    #allocation6 [shape = 's32[1]{0}', space=sflag, size = 0x4, scoped, tag = 'scoped memory for tpu_custom_call.1']
    #allocation7 [shape = 'u8[65536]{0}', space=vmem, size = 0x10000, scoped, tag = 'input window, operand 3, single buffered']
    #allocation8 [shape = 'u8[65536]{0}', space=vmem, size = 0x10000, scoped, tag = 'input window, operand 5, single buffered']
    #allocation9 [shape = 's32[1]{0}', space=sflag, size = 0x4, scoped, tag = 'scoped memory for tpu_custom_call.1']
    #allocation10 [shape = 'u8[4096]{0}', space=vmem, size = 0x1000, scoped, tag = 'output window, operand 0, single buffered']
    %12 = vsyncpa [#allocation3], 0
    %13 = vsyncpa [#allocation6], 0
    %14 = vsyncpa [#allocation9], 0
    %15 = vsyncpa [#allocation4], 0
    // Predicated region
    $region2: #{tpu_custom_call.1} parent=1 // pred_check
      _
    $region3: #{tpu_custom_call.1} parent=1 // pred_check_branch
      %17 = sbr.rel (0) target = $region5
    $region4: #{tpu_custom_call.1} parent=1 // pred_region
      %19 = vsyncadd [#allocation3], 0
      %s21 = sshll.u32 %s0, 4
      %s22 = int_to_ptr.hbm [resolvable:$true] %s21
      %s23 = sshll.u32 [#allocation2], 4
      %s24 = int_to_ptr.vmem [resolvable:$true] %s23
      %26 = dma.hbm_to_vmem [thread:$0]  %s22, 128, %s24, [#allocation3]
    $region5: #{tpu_custom_call.1} parent=1 // pred_fallthru
      _
    // Predicated region
    $region6: #{tpu_custom_call.1} parent=1 // pred_check
      _
    $region7: #{tpu_custom_call.1} parent=1 // pred_check_branch
      %28 = sbr.rel (0) target = $region9
    $region8: #{tpu_custom_call.1} parent=1 // pred_region
      %30 = vsyncadd [#allocation6], 0
      %s31 = sshll.u32 %s1, 4
      %s32 = int_to_ptr.hbm [resolvable:$true] %s31
      %s33 = sshll.u32 [#allocation5], 4
      %s34 = int_to_ptr.vmem [resolvable:$true] %s33
      %39 = dma.hbm_to_vmem [thread:$0]  %s32, 512, %s34, [#allocation6], 128, 128, 8
    $region9: #{tpu_custom_call.1} parent=1 // pred_fallthru
      _
    // Predicated region
    $region10: #{tpu_custom_call.1} parent=1 // pred_check
      _
    $region11: #{tpu_custom_call.1} parent=1 // pred_check_branch
      %41 = sbr.rel (0) target = $region13
    $region12: #{tpu_custom_call.1} parent=1 // pred_region
      _
    $region13: #{tpu_custom_call.1} parent=1 // pred_fallthru
      _
    // Predicated region
    $region14: #{tpu_custom_call.1} parent=1 // pred_check
      _
    $region15: #{tpu_custom_call.1} parent=1 // pred_check_branch
      %43 = sbr.rel (0) target = $region17
    $region16: #{tpu_custom_call.1} parent=1 // pred_region
      %45 = vsyncadd [#allocation6], 0
      %s46 = sshll.u32 %s3, 4
      %s47 = int_to_ptr.hbm [resolvable:$true] %s46
      %s48 = sshll.u32 [#allocation7], 4
      %s49 = int_to_ptr.vmem [resolvable:$true] %s48
      %54 = dma.hbm_to_vmem [thread:$0]  %s47, 2048, %s49, [#allocation6], 128, 128, 8
    $region17: #{tpu_custom_call.1} parent=1 // pred_fallthru
      _
    // Predicated region
    $region18: #{tpu_custom_call.1} parent=1 // pred_check
      _
    $region19: #{tpu_custom_call.1} parent=1 // pred_check_branch
      %56 = sbr.rel (0) target = $region21
    $region20: #{tpu_custom_call.1} parent=1 // pred_region
      _
    $region21: #{tpu_custom_call.1} parent=1 // pred_fallthru
      _
    // Predicated region
    $region22: #{tpu_custom_call.1} parent=1 // pred_check
      _
    $region23: #{tpu_custom_call.1} parent=1 // pred_check_branch
      %58 = sbr.rel (0) target = $region25
    $region24: #{tpu_custom_call.1} parent=1 // pred_region
      %60 = vsyncadd [#allocation9], 0
      %s61 = sshll.u32 %s5, 4
      %s62 = int_to_ptr.hbm [resolvable:$true] %s61
      %s63 = sshll.u32 [#allocation8], 4
      %s64 = int_to_ptr.vmem [resolvable:$true] %s63
      %69 = dma.hbm_to_vmem [thread:$0]  %s62, 2048, %s64, [#allocation9], 128, 128, 8
    $region25: #{tpu_custom_call.1} parent=1 // pred_fallthru
      _
    // Predicated region
    $region26: #{tpu_custom_call.1} parent=1 // pred_check
      _
    $region27: #{tpu_custom_call.1} parent=1 // pred_check_branch
      %71 = sbr.rel (0) target = $region29
    $region28: #{tpu_custom_call.1} parent=1 // pred_region
      _
    $region29: #{tpu_custom_call.1} parent=1 // pred_fallthru
      _
    // Predicated region
    $region30: #{tpu_custom_call.1} parent=1 // pred_check
      _
    $region31: #{tpu_custom_call.1} parent=1 // pred_check_branch
      %73 = sbr.rel (0) target = $region33
    $region32: #{tpu_custom_call.1} parent=1 // pred_region
      %75 = dma.done [#allocation3], 128
    $region33: #{tpu_custom_call.1} parent=1 // pred_fallthru
      _
    // Predicated region
    $region34: #{tpu_custom_call.1} parent=1 // pred_check
      _
    $region35: #{tpu_custom_call.1} parent=1 // pred_check_branch
      %77 = sbr.rel (0) target = $region37
    $region36: #{tpu_custom_call.1} parent=1 // pred_region
      %79 = dma.done [#allocation6], 512
    $region37: #{tpu_custom_call.1} parent=1 // pred_fallthru
      _
    // Predicated region
    $region38: #{tpu_custom_call.1} parent=1 // pred_check
      _
    $region39: #{tpu_custom_call.1} parent=1 // pred_check_branch
      %81 = sbr.rel (0) target = $region41
    $region40: #{tpu_custom_call.1} parent=1 // pred_region
      %83 = dma.done [#allocation6], 2048
    $region41: #{tpu_custom_call.1} parent=1 // pred_fallthru
      _
    // Predicated region
    $region42: #{tpu_custom_call.1} parent=1 // pred_check
      _
    $region43: #{tpu_custom_call.1} parent=1 // pred_check_branch
      %85 = sbr.rel (0) target = $region45
    $region44: #{tpu_custom_call.1} parent=1 // pred_region
      %87 = dma.done [#allocation9], 2048
    $region45: #{tpu_custom_call.1} parent=1 // pred_fallthru
      _
    %v88 = vld [vmem:[#allocation2] sm:$0xff]
    %v89 = vld [vmem:[#allocation5] sm:$0xff]
    %v90 = vld [vmem:[#allocation5 + $0x8] sm:$0xff]
    %v91 = vld [vmem:[#allocation5 + $0x10] sm:$0xff]
    %v92 = vld [vmem:[#allocation5 + $0x18] sm:$0xff]
    %v93 = vld [vmem:[%s2] sm:$0x1]
    %v95 = vperm.slane %v93, 0
    %vm97 = vcmask 261120
    %v99 = vsel %vm97, %v88, 0
    %101 = vmatpush.msra.mxu0 0.0
    %102 = vmatpush.msra.mxu0 0.0
    %103 = vmatpush.msra.mxu0 0.0
    %104 = vmatpush.msra.mxu0 0.0
    %105 = vmatpush.msra.mxu0 0.0
    %106 = vmatpush.msra.mxu0 0.0
    %107 = vmatpush.msra.mxu0 0.0
    %108 = vmatpush.msra.mxu0 0.0
    %109 = vmatpush.msra.mxu0 0.0
    %110 = vmatpush.msra.mxu0 0.0
    %111 = vmatpush.msra.mxu0 0.0
    %112 = vmatpush.msra.mxu0 0.0
    %113 = vmatpush.msra.mxu0 %v92
    %114 = vmatpush.msra.mxu0 %v91
    %115 = vmatpush.msra.mxu0 %v90
    %116 = vmatpush.msra.mxu0 %v89
    %117 = vmatmul.f32.gmra.mxu0 %v99
    %v118 = vpop.f32.mrf.mxu0
    %v119 = vadd.f32 %v95, %v118
    %120 = vdwg.mxu0
    %v121 = vld [vmem:[#allocation7] sm:$0xff]
    %v122 = vld [vmem:[#allocation7 + $0x8] sm:$0xff]
    %v123 = vld [vmem:[#allocation7 + $0x10] sm:$0xff]
    %v124 = vld [vmem:[#allocation7 + $0x18] sm:$0xff]
    %v125 = vld [vmem:[#allocation7 + $0x20] sm:$0xff]
    %v126 = vld [vmem:[#allocation7 + $0x28] sm:$0xff]
    %v127 = vld [vmem:[#allocation7 + $0x30] sm:$0xff]
    %v128 = vld [vmem:[#allocation7 + $0x38] sm:$0xff]
    %v129 = vld [vmem:[#allocation7 + $0x40] sm:$0xff]
    %v130 = vld [vmem:[#allocation7 + $0x48] sm:$0xff]
    %v131 = vld [vmem:[#allocation7 + $0x50] sm:$0xff]
    %v132 = vld [vmem:[#allocation7 + $0x58] sm:$0xff]
    %v133 = vld [vmem:[#allocation7 + $0x60] sm:$0xff]
    %v134 = vld [vmem:[#allocation7 + $0x68] sm:$0xff]
    %v135 = vld [vmem:[#allocation7 + $0x70] sm:$0xff]
    %v136 = vld [vmem:[#allocation7 + $0x78] sm:$0xff]
    %v137 = vld [vmem:[%s4] sm:$0x1]
    %v139 = vperm.slane %v137, 0
    %141 = vmatpush.msra.mxu0 %v136
    %142 = vmatpush.msra.mxu0 %v135
    %143 = vmatpush.msra.mxu0 %v134
    %144 = vmatpush.msra.mxu0 %v133
    %145 = vmatpush.msra.mxu0 %v132
    %146 = vmatpush.msra.mxu0 %v131
    %147 = vmatpush.msra.mxu0 %v130
    %148 = vmatpush.msra.mxu0 %v129
    %149 = vmatpush.msra.mxu0 %v128
    %150 = vmatpush.msra.mxu0 %v127
    %151 = vmatpush.msra.mxu0 %v126
    %152 = vmatpush.msra.mxu0 %v125
    %153 = vmatpush.msra.mxu0 %v124
    %154 = vmatpush.msra.mxu0 %v123
    %155 = vmatpush.msra.mxu0 %v122
    %156 = vmatpush.msra.mxu0 %v121
    %157 = vmatmul.f32.gmra.mxu0 %v119
    %v158 = vpop.f32.mrf.mxu0
    %v159 = vadd.f32 %v139, %v158
    %160 = vdwg.mxu0
    %v161 = vld [vmem:[#allocation8] sm:$0xff]
    %v162 = vld [vmem:[#allocation8 + $0x8] sm:$0xff]
    %v163 = vld [vmem:[#allocation8 + $0x10] sm:$0xff]
    %v164 = vld [vmem:[#allocation8 + $0x18] sm:$0xff]
    %v165 = vld [vmem:[#allocation8 + $0x20] sm:$0xff]
    %v166 = vld [vmem:[#allocation8 + $0x28] sm:$0xff]
    %v167 = vld [vmem:[#allocation8 + $0x30] sm:$0xff]
    %v168 = vld [vmem:[#allocation8 + $0x38] sm:$0xff]
    %v169 = vld [vmem:[#allocation8 + $0x40] sm:$0xff]
    %v170 = vld [vmem:[#allocation8 + $0x48] sm:$0xff]
    %v171 = vld [vmem:[#allocation8 + $0x50] sm:$0xff]
    %v172 = vld [vmem:[#allocation8 + $0x58] sm:$0xff]
    %v173 = vld [vmem:[#allocation8 + $0x60] sm:$0xff]
    %v174 = vld [vmem:[#allocation8 + $0x68] sm:$0xff]
    %v175 = vld [vmem:[#allocation8 + $0x70] sm:$0xff]
    %v176 = vld [vmem:[#allocation8 + $0x78] sm:$0xff]
    %v177 = vld [vmem:[%s6] sm:$0x1]
    %v179 = vperm.slane %v177, 0
    %181 = vmatpush.msra.mxu0 %v176
    %182 = vmatpush.msra.mxu0 %v175
    %183 = vmatpush.msra.mxu0 %v174
    %184 = vmatpush.msra.mxu0 %v173
    %185 = vmatpush.msra.mxu0 %v172
    %186 = vmatpush.msra.mxu0 %v171
    %187 = vmatpush.msra.mxu0 %v170
    %188 = vmatpush.msra.mxu0 %v169
    %189 = vmatpush.msra.mxu0 %v168
    %190 = vmatpush.msra.mxu0 %v167
    %191 = vmatpush.msra.mxu0 %v166
    %192 = vmatpush.msra.mxu0 %v165
    %193 = vmatpush.msra.mxu0 %v164
    %194 = vmatpush.msra.mxu0 %v163
    %195 = vmatpush.msra.mxu0 %v162
    %196 = vmatpush.msra.mxu0 %v161
    %197 = vmatmul.f32.gmra.mxu0 %v159
    %v198 = vpop.f32.mrf.mxu0
    %v199 = vadd.f32 %v179, %v198
    %200 = vdwg.mxu0
    %201 = vst [vmem:[#allocation10] sm:$0xff] %v199
    // Predicated region
    $region46: #{tpu_custom_call.1} parent=1 // pred_check
      _
    $region47: #{tpu_custom_call.1} parent=1 // pred_check_branch
      %203 = sbr.rel (0) target = $region49
    $region48: #{tpu_custom_call.1} parent=1 // pred_region
      %205 = vsyncadd [#allocation4], 0
      %s207 = sshll.u32 [#allocation10], 4
      %s208 = int_to_ptr.vmem [resolvable:$true] %s207
      %s209 = sshll.u32 %s7, 4
      %s210 = int_to_ptr.hbm [resolvable:$true] %s209
      %212 = dma.vmem_to_hbm [thread:$0]  %s208, 128, %s210, [#allocation4]
    $region49: #{tpu_custom_call.1} parent=1 // pred_fallthru
      _
    // Predicated region
    $region50: #{tpu_custom_call.1} parent=1 // pred_check
      _
    $region51: #{tpu_custom_call.1} parent=1 // pred_check_branch
      %214 = sbr.rel (0) target = $region53
    $region52: #{tpu_custom_call.1} parent=1 // pred_region
      %216 = dma.done [#allocation4], 128
    $region53: #{tpu_custom_call.1} parent=1 // pred_fallthru
      _
    %217 = vsyncpa [#allocation3], 1
    %218 = vsyncpa [#allocation6], 1
    %219 = vsyncpa [#allocation9], 1
    %220 = vsyncpa [#allocation4], 1

</llo_original>
